<compile_context>
chip_gen: v6e
topology: v6e:2x2x1
jax: 0.10.0
libtpu: 0.0.40
codegen_flags: <defaults>
</compile_context>

<pallas_src>
import math
import functools

import jax
import jax.numpy as jnp
from jax.experimental import pallas as pl
from jax.experimental.pallas import tpu as pltpu


def _round_up(x, n):
    return ((x + n - 1) // n) * n


def _cdiv(a, b):
    return -(-a // b)


def _vmem_capacity_bytes():
    """Physical VMEM per TensorCore (v7x is only 64 MiB); used to clamp requests."""
    try:
        cap = int(pltpu.get_tpu_info().vmem_capacity_bytes)
        if cap > 0:
            return cap
    except Exception:
        pass
    try:
        kind = jax.devices()[0].device_kind.lower()
        if any(tag in kind for tag in ("v4", "v5", "v6")):
            return 128 << 20
    except Exception:
        pass
    return 64 << 20  # conservative default (v7x-sized)


def _prefers_256_lanes():
    """v6e / v7x MXUs are 2x256^2 -> pad feature dims >128 to multiples of 256."""
    try:
        kind = jax.devices()[0].device_kind.lower()
    except Exception:
        return True
    return not any(tag in kind for tag in ("v2", "v3", "v4", "v5"))


def _pad_dim(d, prefer256):
    p = _round_up(d, 128)
    if prefer256 and d > 128 and p % 256:
        p = _round_up(d, 256)
    return p


def _mlp_kernel(x_ref, w1_ref, b1_ref, w2_ref, b2_ref, o_ref, acc_ref, *, approx_gelu):
    # x_ref:  (tm, Din_p)   w1_ref: (Din_p, th)  b1_ref: (1, th)
    # w2_ref: (th, tn)      b2_ref: (1, tn)      o_ref:  (tm, tn)
    # acc_ref: (tm, tn) f32 scratch, resident across the hidden (reduction) axis.
    h_idx = pl.program_id(2)

    @pl.when(h_idx == 0)
    def _():
        acc_ref[...] = jnp.zeros_like(acc_ref)

    # fc1 slab for this hidden slice (f32 accumulation on the MXU).
    h = jnp.dot(x_ref[...], w1_ref[...], preferred_element_type=jnp.float32)
    h = h + b1_ref[...].astype(jnp.float32)
    if approx_gelu:
        # tanh approximation routes to the EUP slot (frees VALU); not PyTorch default.
        h = jax.nn.gelu(h, approximate=True)
    else:
        # Exact erf GELU == torch.nn.GELU() default, kept in f32.
        h = 0.5 * h * (1.0 + jax.lax.erf(h * (1.0 / math.sqrt(2.0))))
    # dropout(p=0.0) is identity -> skipped.
    acc_ref[...] += jnp.dot(h.astype(w2_ref.dtype), w2_ref[...],
                            preferred_element_type=jnp.float32)

    @pl.when(h_idx == pl.num_programs(2) - 1)
    def _():
        o_ref[...] = (acc_ref[...] + b2_ref[...].astype(jnp.float32)).astype(o_ref.dtype)


@functools.partial(jax.jit,
                   static_argnames=("tile_m", "tile_h", "tile_n", "approx_gelu"))
def mlp_pallas(x, w1, b1, w2, b2, *, tile_m=None, tile_h=None, tile_n=None,
               approx_gelu=False):
    """x: (..., in_features); w1: (in, hidden); b1: (hidden,); w2: (hidden, out); b2: (out,)."""
    orig_shape = x.shape
    d_in = orig_shape[-1]
    d_hidden = w1.shape[1]
    d_out = w2.shape[1]

    x2 = x.reshape(-1, d_in)
    m = x2.shape[0]

    itemsize = jnp.dtype(x.dtype).itemsize
    sublane = 8 if itemsize >= 4 else 16
    prefer256 = _prefers_256_lanes()
    lane_g = 256 if prefer256 else 128

    d_in_p = _pad_dim(d_in, prefer256)
    d_out_p = _pad_dim(d_out, prefer256)
    h_full = _pad_dim(d_hidden, prefer256)

    # --- VMEM budget, clamped to real hardware capacity ------------------------------
    vmem_cap = _vmem_capacity_bytes()
    budget = int(vmem_cap * 0.70)           # headroom for Mosaic internal scratch etc.

    # Pallas double-buffers every input block, so resident weights cost ~2x their size.
    weight_bytes = (d_in_p * h_full + h_full * d_out_p) * itemsize
    resident = (tile_h is None) and (2 * weight_bytes <= (budget * 3) // 5)

    # --- Dout tile (tn) ---------------------------------------------------------------
    if tile_n is not None:
        tn = min(_round_up(tile_n, 128), d_out_p)
    elif resident or d_out_p <= 2048:
        tn = d_out_p                          # single Dout tile: no w2 re-stream per j
    else:
        n_n = _cdiv(d_out_p, 1024)
        tn = _round_up(_cdiv(d_out_p, n_n), lane_g)
    d_out_pad = _round_up(d_out_p, tn)

    # --- hidden tile (th) ---------------------------------------------------------------
    if tile_h is not None:
        th = min(_round_up(tile_h, 128), h_full)
    elif resident:
        th = h_full                           # weights fully VMEM-resident, DMA'd once
    else:
        # Largest hidden slab whose double-buffered w1/w2 slabs use <= half the budget.
        th_cap = (budget // 2) // max(2 * (d_in_p + tn) * itemsize, 1)
        th_cap = max(lane_g, min((th_cap // lane_g) * lane_g, h_full))
        n_h = _cdiv(h_full, th_cap)
        th = _round_up(_cdiv(h_full, n_h), lane_g)
    h_pad = _round_up(h_full, th)

    # --- M tile (tm): as large as the remaining VMEM allows ----------------------------
    # Per-row cost: double-buffered x/out tiles + f32 accumulator + live f32 GELU
    # intermediate between the two matmuls.
    per_row = 2 * d_in_p * itemsize + 2 * tn * itemsize + 4 * tn + 4 * th
    fixed = (2 * (d_in_p * th + th * tn) + 2 * 8 * (th + tn)) * itemsize
    if tile_m is not None:
        tm = _round_up(min(tile_m, m), sublane)
    else:
        tm_req = max((budget - fixed) // per_row, sublane)
        # Guarantee >=2 M tiles (v7x megacore sharding); >=4 when weights are resident
        # (extra M tiles are free there — no weight re-streaming).
        min_tiles = 4 if resident else 2
        if m > min_tiles * sublane:
            tm_req = min(tm_req, _round_up(_cdiv(m, min_tiles), sublane))
        tm_req = min(tm_req, 1024)
        tm = _round_up(min(tm_req, m), sublane)
    tm = max(tm, sublane)
    m_pad = _round_up(m, tm)

    m_tiles = m_pad // tm
    n_tiles = d_out_pad // tn
    h_tiles = h_pad // th
    grid = (m_tiles, n_tiles, h_tiles)

    # --- zero padding (inert: GELU(0)=0, padded w2 rows/cols are 0, extras sliced off) --
    def pad2(a, rows, cols):
        pr, pc = rows - a.shape[0], cols - a.shape[1]
        return jnp.pad(a, ((0, pr), (0, pc))) if (pr or pc) else a

    x2p = pad2(x2, m_pad, d_in_p)
    w1p = pad2(w1, d_in_p, h_pad)
    b1p = pad2(b1.reshape(1, -1), 1, h_pad)
    w2p = pad2(w2, h_pad, d_out_pad)
    b2p = pad2(b2.reshape(1, -1), 1, d_out_pad)

    # --- VMEM limit sized from the real tile footprint, hard-clamped to HW capacity ----
    footprint = fixed + tm * per_row
    vmem_limit = max(int(footprint * 1.25) + (4 << 20), 32 << 20)
    vmem_limit = min(vmem_limit, vmem_cap - (1 << 20))
    vmem_limit = max(vmem_limit, min(footprint + (2 << 20), vmem_cap - (1 << 20)))

    # --- cost estimate (accounts for weight re-streaming) -------------------------------
    w1_reads = 1 if h_tiles == 1 else m_tiles * n_tiles
    w2_reads = 1 if (h_tiles == 1 and n_tiles == 1) else m_tiles
    cost = pl.CostEstimate(
        flops=2 * m * (d_in * d_hidden * n_tiles + d_hidden * d_out),
        transcendentals=m * d_hidden * n_tiles,
        bytes_accessed=(x2.size + m * d_out + b1.size + b2.size) * itemsize
                       + w1.size * itemsize * w1_reads
                       + w2.size * itemsize * w2_reads,
    )

    kernel = functools.partial(_mlp_kernel, approx_gelu=approx_gelu)

    out2 = pl.pallas_call(
        kernel,
        out_shape=jax.ShapeDtypeStruct((m_pad, d_out_pad), x.dtype),
        grid_spec=pltpu.PrefetchScalarGridSpec(
            num_scalar_prefetch=0,
            grid=grid,
            in_specs=[
                pl.BlockSpec((tm, d_in_p), lambda i, j, h: (i, 0)),     # x tile
                pl.BlockSpec((d_in_p, th), lambda i, j, h: (0, h)),     # w1 slab
                pl.BlockSpec((1, th), lambda i, j, h: (0, h)),          # b1 slice
                pl.BlockSpec((th, tn), lambda i, j, h: (h, j)),         # w2 slab
                pl.BlockSpec((1, tn), lambda i, j, h: (0, j)),          # b2 slice
            ],
            out_specs=pl.BlockSpec((tm, tn), lambda i, j, h: (i, j)),
            scratch_shapes=[pltpu.VMEM((tm, tn), jnp.float32)],
        ),
        compiler_params=pltpu.CompilerParams(
            dimension_semantics=("parallel", "parallel", "arbitrary"),
            vmem_limit_bytes=int(vmem_limit),
        ),
        cost_estimate=cost,
    )(x2p, w1p, b1p, w2p, b2p)

    out2 = out2[:m, :d_out]
    return out2.reshape(*orig_shape[:-1], d_out)


def mlp_reference(x, w1, b1, w2, b2, approx_gelu=False):
    h = jnp.dot(x.astype(jnp.float32), w1.astype(jnp.float32)) + b1.astype(jnp.float32)
    h = jax.nn.gelu(h, approximate=approx_gelu)
    return jnp.dot(h, w2.astype(jnp.float32)) + b2.astype(jnp.float32)


def _init_params(key, d_in, d_hidden, d_out, dtype):
    k1, kb1, k2, kb2 = jax.random.split(key, 4)
    bound1 = 1.0 / math.sqrt(d_in)
    w1 = jax.random.uniform(k1, (d_in, d_hidden), jnp.float32, -bound1, bound1)
    b1 = jax.random.uniform(kb1, (d_hidden,), jnp.float32, -bound1, bound1)
    bound2 = 1.0 / math.sqrt(d_hidden)
    w2 = jax.random.uniform(k2, (d_hidden, d_out), jnp.float32, -bound2, bound2)
    b2 = jax.random.uniform(kb2, (d_out,), jnp.float32, -bound2, bound2)
    return (w1.astype(dtype), b1.astype(dtype), w2.astype(dtype), b2.astype(dtype))


if __name__ == "__main__":
    key = jax.random.PRNGKey(0)

    # --- Test 1: f32, explicit tiny tiles -> grid (2, 2, 2); exercises the hidden-dim
    #     accumulator, the Dout tiling axis, and Din padding 32 -> 128.
    batch, seq = 2, 8
    d_in, d_hidden, d_out = 32, 256, 256
    kx, kp = jax.random.split(key)
    x = jax.random.normal(kx, (batch, seq, d_in), dtype=jnp.float32)
    w1, b1, w2, b2 = _init_params(kp, d_in, d_hidden, d_out, jnp.float32)

    out = jax.block_until_ready(
        mlp_pallas(x, w1, b1, w2, b2, tile_m=8, tile_h=128, tile_n=128))
    ref = mlp_reference(x, w1, b1, w2, b2)
    assert out.shape == (batch, seq, d_out)
    assert jnp.allclose(out, ref, atol=1e-4, rtol=1e-4), "f32 tiled mismatch"

    # --- Test 2: bf16, fully auto tiles -> weight-resident path (hidden axis collapses),
    #     f32 accumulation, multiple M tiles for TensorCore sharding.
    batch2, seq2 = 2, 128
    d_in2, d_hidden2, d_out2 = 128, 512, 128
    kx2, kp2 = jax.random.split(jax.random.PRNGKey(1))
    x2 = jax.random.normal(kx2, (batch2, seq2, d_in2), jnp.float32).astype(jnp.bfloat16)
    w1b, b1b, w2b, b2b = _init_params(kp2, d_in2, d_hidden2, d_out2, jnp.bfloat16)

    out_bf16 = jax.block_until_ready(mlp_pallas(x2, w1b, b1b, w2b, b2b))
    ref_bf16 = mlp_reference(x2, w1b, b1b, w2b, b2b)
    assert out_bf16.shape == (batch2, seq2, d_out2)
    assert jnp.allclose(out_bf16.astype(jnp.float32), ref_bf16, atol=5e-2, rtol=5e-2), \
        "bf16 auto-tile mismatch"

    # --- Test 3: f32, auto tiles, hidden not a multiple of the MXU granule and
    #     out_features != in_features (hidden 384 pads to 512 on 256-wide MXUs).
    batch3, seq3 = 3, 16
    d_in3, d_hidden3, d_out3 = 128, 384, 64
    kx3, kp3 = jax.random.split(jax.random.PRNGKey(2))
    x3 = jax.random.normal(kx3, (batch3, seq3, d_in3), dtype=jnp.float32)
    w13, b13, w23, b23 = _init_params(kp3, d_in3, d_hidden3, d_out3, jnp.float32)

    out3 = jax.block_until_ready(mlp_pallas(x3, w13, b13, w23, b23))
    ref3 = mlp_reference(x3, w13, b13, w23, b23)
    assert out3.shape == (batch3, seq3, d_out3)
    assert jnp.allclose(out3, ref3, atol=1e-4, rtol=1e-4), "f32 auto-tile mismatch"

    # --- Test 4: optional tanh-approx GELU path (not the PyTorch-parity default).
    out4 = jax.block_until_ready(mlp_pallas(x, w1, b1, w2, b2, approx_gelu=True))
    ref4 = mlp_reference(x, w1, b1, w2, b2, approx_gelu=True)
    assert jnp.allclose(out4, ref4, atol=1e-4, rtol=1e-4), "approx-GELU mismatch"

    print("KERNEL_OK")
</pallas_src>

<mosaic_0001>
module attributes {stable_mosaic.version = 11 : i64} {
  func.func @_mlp_kernel(%arg0: i32, %arg1: i32, %arg2: i32, %arg3: memref<8x128xf32, #tpu.memory_space<vmem>>, %arg4: memref<128x128xf32, #tpu.memory_space<vmem>>, %arg5: memref<1x128xf32, #tpu.memory_space<vmem>>, %arg6: memref<128x128xf32, #tpu.memory_space<vmem>>, %arg7: memref<1x128xf32, #tpu.memory_space<vmem>>, %arg8: memref<8x128xf32, #tpu.memory_space<vmem>>, %arg9: memref<8x128xf32, #tpu.memory_space<vmem>>) attributes {dimension_semantics = [#tpu.dimension_semantics<parallel>, #tpu.dimension_semantics<parallel>, #tpu.dimension_semantics<arbitrary>], iteration_bounds = array<i64: 2, 2, 2>, scalar_prefetch = 0 : i64, scratch_operands = 1 : i64, tpu.core_type = #tpu.core_type<tc>, window_params = [{transform_indices = @transform_0, window_bounds = array<i64: 8, 128>}, {transform_indices = @transform_1, window_bounds = array<i64: 128, 128>}, {transform_indices = @transform_2, window_bounds = array<i64: 1, 128>}, {transform_indices = @transform_3, window_bounds = array<i64: 128, 128>}, {transform_indices = @transform_4, window_bounds = array<i64: 1, 128>}, {transform_indices = @transform_5, window_bounds = array<i64: 8, 128>}]} {
    %c0_i32 = arith.constant 0 : i32
    %0 = arith.cmpi eq, %arg2, %c0_i32 : i32
    %1 = arith.extui %0 : i1 to i32
    %c0_i32_0 = arith.constant 0 : i32
    %2 = arith.cmpi ne, %1, %c0_i32_0 : i32
    scf.if %2 {
      %cst_17 = arith.constant 0.000000e+00 : f32
      %25 = vector.broadcast %cst_17 : f32 to vector<8x128xf32>
      %c0_18 = arith.constant 0 : index
      %c0_19 = arith.constant 0 : index
      %26 = vector.load %arg9[%c0_18, %c0_19] : memref<8x128xf32, #tpu.memory_space<vmem>>, vector<8x128xf32>
      tpu.vector_store %arg9[%c0_18, %c0_19], %25 {strides = array<i32>} : memref<8x128xf32, #tpu.memory_space<vmem>>, vector<8x128xf32>,
    } else {
    }
    %c0 = arith.constant 0 : index
    %c0_1 = arith.constant 0 : index
    %3 = vector.load %arg3[%c0, %c0_1] : memref<8x128xf32, #tpu.memory_space<vmem>>, vector<8x128xf32>
    %c0_2 = arith.constant 0 : index
    %c0_3 = arith.constant 0 : index
    %4 = vector.load %arg4[%c0_2, %c0_3] : memref<128x128xf32, #tpu.memory_space<vmem>>, vector<128x128xf32>
    %cst = arith.constant dense<0.000000e+00> : vector<8x128xf32>
    %5 = tpu.matmul %3, %4, %cst {dimension_numbers = #tpu.dot_dimension_numbers<[1], [0], [0], [1], [0, 0, 1, 1], [], []>} : vector<8x128xf32>, vector<128x128xf32>, vector<8x128xf32> -> vector<8x128xf32>
    %c0_4 = arith.constant 0 : index
    %c0_5 = arith.constant 0 : index
    %6 = vector.load %arg5[%c0_4, %c0_5] : memref<1x128xf32, #tpu.memory_space<vmem>>, vector<1x128xf32>
    %7 = vector.broadcast %6 : vector<1x128xf32> to vector<8x128xf32>
    %8 = arith.addf %5, %7 : vector<8x128xf32>
    %cst_6 = arith.constant 5.000000e-01 : f32
    %9 = vector.broadcast %cst_6 : f32 to vector<8x128xf32>
    %10 = arith.mulf %9, %8 : vector<8x128xf32>
    %cst_7 = arith.constant 0.707106769 : f32
    %11 = vector.broadcast %cst_7 : f32 to vector<8x128xf32>
    %12 = arith.mulf %8, %11 : vector<8x128xf32>
    %13 = math.erf %12 : vector<8x128xf32>
    %cst_8 = arith.constant 1.000000e+00 : f32
    %14 = vector.broadcast %cst_8 : f32 to vector<8x128xf32>
    %15 = arith.addf %14, %13 : vector<8x128xf32>
    %16 = arith.mulf %10, %15 : vector<8x128xf32>
    %c0_9 = arith.constant 0 : index
    %c0_10 = arith.constant 0 : index
    %17 = vector.load %arg9[%c0_9, %c0_10] : memref<8x128xf32, #tpu.memory_space<vmem>>, vector<8x128xf32>
    %c0_11 = arith.constant 0 : index
    %c0_12 = arith.constant 0 : index
    %18 = vector.load %arg6[%c0_11, %c0_12] : memref<128x128xf32, #tpu.memory_space<vmem>>, vector<128x128xf32>
    %cst_13 = arith.constant dense<0.000000e+00> : vector<8x128xf32>
    %19 = tpu.matmul %16, %18, %cst_13 {dimension_numbers = #tpu.dot_dimension_numbers<[1], [0], [0], [1], [0, 0, 1, 1], [], []>} : vector<8x128xf32>, vector<128x128xf32>, vector<8x128xf32> -> vector<8x128xf32>
    %20 = arith.addf %17, %19 : vector<8x128xf32>
    %c0_14 = arith.constant 0 : index
    %c0_15 = arith.constant 0 : index
    %21 = vector.load %arg9[%c0_14, %c0_15] : memref<8x128xf32, #tpu.memory_space<vmem>>, vector<8x128xf32>
    tpu.vector_store %arg9[%c0_14, %c0_15], %20 {strides = array<i32>} : memref<8x128xf32, #tpu.memory_space<vmem>>, vector<8x128xf32>,
    %c1_i32 = arith.constant 1 : i32
    %22 = arith.cmpi eq, %arg2, %c1_i32 : i32
    %23 = arith.extui %22 : i1 to i32
    %c0_i32_16 = arith.constant 0 : i32
    %24 = arith.cmpi ne, %23, %c0_i32_16 : i32
    scf.if %24 {
      %c0_17 = arith.constant 0 : index
      %c0_18 = arith.constant 0 : index
      %25 = vector.load %arg9[%c0_17, %c0_18] : memref<8x128xf32, #tpu.memory_space<vmem>>, vector<8x128xf32>
      %c0_19 = arith.constant 0 : index
      %c0_20 = arith.constant 0 : index
      %26 = vector.load %arg7[%c0_19, %c0_20] : memref<1x128xf32, #tpu.memory_space<vmem>>, vector<1x128xf32>
      %27 = vector.broadcast %26 : vector<1x128xf32> to vector<8x128xf32>
      %28 = arith.addf %25, %27 : vector<8x128xf32>
      %c0_21 = arith.constant 0 : index
      %c0_22 = arith.constant 0 : index
      %29 = vector.load %arg8[%c0_21, %c0_22] : memref<8x128xf32, #tpu.memory_space<vmem>>, vector<8x128xf32>
      tpu.vector_store %arg8[%c0_21, %c0_22], %28 {strides = array<i32>} : memref<8x128xf32, #tpu.memory_space<vmem>>, vector<8x128xf32>,
    } else {
    }
    return
  }
  func.func @transform_0(%arg0: i32, %arg1: i32, %arg2: i32) -> (i32, i32) {
    %c0_i32 = arith.constant 0 : i32
    %c0_i32_0 = arith.constant 0 : i32
    return %arg0, %c0_i32 : i32, i32
  }
  func.func @transform_1(%arg0: i32, %arg1: i32, %arg2: i32) -> (i32, i32) {
    %c0_i32 = arith.constant 0 : i32
    %c0_i32_0 = arith.constant 0 : i32
    return %c0_i32, %arg2 : i32, i32
  }
  func.func @transform_2(%arg0: i32, %arg1: i32, %arg2: i32) -> (i32, i32) {
    %c0_i32 = arith.constant 0 : i32
    %c0_i32_0 = arith.constant 0 : i32
    return %c0_i32, %arg2 : i32, i32
  }
  func.func @transform_3(%arg0: i32, %arg1: i32, %arg2: i32) -> (i32, i32) {
    %c0_i32 = arith.constant 0 : i32
    return %arg2, %arg1 : i32, i32
  }
  func.func @transform_4(%arg0: i32, %arg1: i32, %arg2: i32) -> (i32, i32) {
    %c0_i32 = arith.constant 0 : i32
    %c0_i32_0 = arith.constant 0 : i32
    return %c0_i32, %arg1 : i32, i32
  }
  func.func @transform_5(%arg0: i32, %arg1: i32, %arg2: i32) -> (i32, i32) {
    %c0_i32 = arith.constant 0 : i32
    return %arg0, %arg1 : i32, i32
  }
}

</mosaic_0001>

<llo_original>
// kernel: mlp_pallas.1
$region0: #{mlp_pallas.1}
  #allocation0 [shape = 'u32[]', space=smem, size = 0x4, offset = 0x4, fixed_abs, tag = 'smem constant byte address 0x4 - core index']
  #allocation1 [shape = 'u32[144,128]{1,0:T(1,128)}', space=vmem, size = 0x12000, scoped, tag = 'internal scratch']
  #allocation2 [shape = 'f32[8,128]{1,0:T(8,128)}', space=vmem, size = 0x1000, scoped, tag = 'scratch operand']
  %s0 = inlined_call_operand.vmem [shape: f32[16,128], index: 0, kind: input, shape index: {}]
  %s1 = inlined_call_operand.vmem [shape: f32[128,256], index: 1, kind: input, shape index: {}]
  %s2 = inlined_call_operand.vmem [shape: f32[1,256], index: 2, kind: input, shape index: {}]
  %s3 = inlined_call_operand.hbm [shape: f32[256,256], index: 3, kind: input, shape index: {}]
  %s4 = inlined_call_operand.vmem [shape: f32[1,256], index: 4, kind: input, shape index: {}]
  %s5 = inlined_call_operand.hbm [shape: f32[16,256], index: 5, kind: output, shape index: {}]
  %s6 = sld [smem:[#allocation0]]
  $region103: #{mlp_pallas.1} parent=0
    _
  %s8 = ssub.s32 1, %s6
  %s9 = scalar_select 0, %s8, %s6
  $region1: #{mlp_pallas.1} parent=0
    #allocation3 [shape = 'u8[131072]{0}', space=vmem, size = 0x20000, scoped, tag = 'input window, operand 1']
    #allocation4 [shape = 'u8[131072]{0}', space=vmem, size = 0x20000, scoped, tag = 'input window, operand 3']
    #allocation5 [shape = 's32[2]{0}', space=sflag, size = 0x8, scoped, tag = 'scoped memory for mlp_pallas.1']
    #allocation6 [shape = 's32[2]{0}', space=sflag, size = 0x8, scoped, tag = 'scoped memory for mlp_pallas.1']
    #allocation7 [shape = 'u8[8192]{0}', space=vmem, size = 0x2000, scoped, tag = 'output window, operand 0']
    %10 = vsyncpa [#allocation5], 0
    %s11 = scalar_lea.sflag [#allocation5], 1
    %12 = vsyncpa %s11, 0
    %13 = vsyncpa [#allocation6], 0
    %s14 = scalar_lea.sflag [#allocation6], 1
    %15 = vsyncpa %s14, 0
    loop: start=0, step=1, limit=10
    $region2: #{mlp_pallas.1} parent=1 // loop_pre_header
      _
    $region3: #{mlp_pallas.1} parent=1 // loop_header
      %s17 = sphi 0, %s21
      %p18 = scmp.ge.s32.totalorder %s17, 10
      %s24 = sphi 0, %s43
      %s25 = sphi 0, %s39
      %s26 = sphi 0, %s35
      %s27 = sphi 0, %s24
      %s28 = sphi 0, %s25
      %s29 = sphi 0, %s26
      %s30 = sphi 0, %s27
      %s31 = sphi 0, %s28
      %s32 = sphi 0, %s29
      %s46 = sphi 0, %s48
      %s49 = sphi 0, %s46
      %s50 = sphi 0, %s49
      %s66 = sphi 0, %s50
      %s72 = sphi 0, %s74
      %s75 = sphi 0, %s72
      %s76 = sphi 0, %s75
      %s92 = sphi 0, %s76
      %s98 = sphi 0, %s100
      %s101 = sphi 0, %s98
      %s102 = sphi 0, %s101
      %s118 = sphi 0, %s102
      %s126 = sphi 0, %s128
      %s129 = sphi 0, %s126
      %s130 = sphi 0, %s129
      %s146 = sphi 0, %s130
      %s152 = sphi 0, %s154
      %s155 = sphi 0, %s152
      %s156 = sphi 0, %s155
      %s172 = sphi 0, %s156
      %s180 = sphi 0, %s182
      %s183 = sphi 0, %s180
      %s184 = sphi 0, %s183
      %s200 = sphi 0, %s184
    $region4: #{mlp_pallas.1} parent=1 // loop_header_branch
      %20 = sbr.rel (%p18) target = $region8
    $region5: #{mlp_pallas.1} parent=1 // loop_body
      %s22 = ssub.s32 %s17, 1
      %s23 = ssub.s32 %s17, 2
      %s33 = sadd.s32 1, %s26
      %p34 = scmp.ge.s32.totalorder %s33, 2
      %s35 = scalar_select %p34, 0, %s33
      %s36 = sadd.s32 1, %s25
      %s37 = scalar_select %p34, %s36, %s25
      %p38 = scmp.ge.s32.totalorder %s37, 2
      %s39 = scalar_select %p38, 0, %s37
      %s40 = sadd.s32 1, %s24
      %s41 = scalar_select %p38, %s40, %s24
      %p42 = scmp.ge.s32.totalorder %s41, 2
      %s43 = scalar_select %p42, 0, %s41
      %s44 = ssub.s32 %s24, %s43
      %p45 = scmp.eq.s32.totalorder %s44, 0
      %s47 = sadd.s32 %s46, 1
      %s48 = scalar_select %p45, %s46, %s47
      %p51 = pneg %p45
      %p52 = scmp.eq.s32.totalorder %s17, 7
      %p53 = por %p51, %p52
      %p54 = scmp.ne.s32.totalorder %s46, %s49
      %p55 = scmp.eq.s32.totalorder %s17, 0
      %p56 = por %p54, %p55
      %p57 = scmp.ne.s32.totalorder %s46, %s49
      %p58 = scmp.eq.s32.totalorder %s22, 7
      %p59 = por %p57, %p58
      %p60 = scmp.ne.s32.totalorder %s49, %s50
      %p61 = scmp.eq.s32.totalorder %s22, 0
      %p62 = por %p60, %p61
      %p63 = scmp.ne.s32.totalorder %s49, %s50
      %p64 = scmp.eq.s32.totalorder %s23, 7
      %p65 = por %p63, %p64
      %p67 = scmp.ne.s32.totalorder %s50, %s66
      %p68 = scmp.eq.s32.totalorder %s23, 0
      %p69 = por %p67, %p68
      %s70 = ssub.s32 %s26, %s35
      %p71 = scmp.eq.s32.totalorder %s70, 0
      %s73 = sadd.s32 %s72, 1
      %s74 = scalar_select %p71, %s72, %s73
      %p77 = pneg %p71
      %p78 = scmp.eq.s32.totalorder %s17, 7
      %p79 = por %p77, %p78
      %p80 = scmp.ne.s32.totalorder %s72, %s75
      %p81 = scmp.eq.s32.totalorder %s17, 0
      %p82 = por %p80, %p81
      %p83 = scmp.ne.s32.totalorder %s72, %s75
      %p84 = scmp.eq.s32.totalorder %s22, 7
      %p85 = por %p83, %p84
      %p86 = scmp.ne.s32.totalorder %s75, %s76
      %p87 = scmp.eq.s32.totalorder %s22, 0
      %p88 = por %p86, %p87
      %p89 = scmp.ne.s32.totalorder %s75, %s76
      %p90 = scmp.eq.s32.totalorder %s23, 7
      %p91 = por %p89, %p90
      %p93 = scmp.ne.s32.totalorder %s76, %s92
      %p94 = scmp.eq.s32.totalorder %s23, 0
      %p95 = por %p93, %p94
      %s96 = ssub.s32 %s26, %s35
      %p97 = scmp.eq.s32.totalorder %s96, 0
      %s99 = sadd.s32 %s98, 1
      %s100 = scalar_select %p97, %s98, %s99
      %p103 = pneg %p97
      %p104 = scmp.eq.s32.totalorder %s17, 7
      %p105 = por %p103, %p104
      %p106 = scmp.ne.s32.totalorder %s98, %s101
      %p107 = scmp.eq.s32.totalorder %s17, 0
      %p108 = por %p106, %p107
      %p109 = scmp.ne.s32.totalorder %s98, %s101
      %p110 = scmp.eq.s32.totalorder %s22, 7
      %p111 = por %p109, %p110
      %p112 = scmp.ne.s32.totalorder %s101, %s102
      %p113 = scmp.eq.s32.totalorder %s22, 0
      %p114 = por %p112, %p113
      %p115 = scmp.ne.s32.totalorder %s101, %s102
      %p116 = scmp.eq.s32.totalorder %s23, 7
      %p117 = por %p115, %p116
      %p119 = scmp.ne.s32.totalorder %s102, %s118
      %p120 = scmp.eq.s32.totalorder %s23, 0
      %p121 = por %p119, %p120
      %s122 = ssub.s32 %s26, %s35
      %s123 = ssub.s32 %s25, %s39
      %s124 = sor.u32 %s122, %s123
      %p125 = scmp.eq.s32.totalorder %s124, 0
      %s127 = sadd.s32 %s126, 1
      %s128 = scalar_select %p125, %s126, %s127
      %p131 = pneg %p125
      %p132 = scmp.eq.s32.totalorder %s17, 7
      %p133 = por %p131, %p132
      %p134 = scmp.ne.s32.totalorder %s126, %s129
      %p135 = scmp.eq.s32.totalorder %s17, 0
      %p136 = por %p134, %p135
      %p137 = scmp.ne.s32.totalorder %s126, %s129
      %p138 = scmp.eq.s32.totalorder %s22, 7
      %p139 = por %p137, %p138
      %p140 = scmp.ne.s32.totalorder %s129, %s130
      %p141 = scmp.eq.s32.totalorder %s22, 0
      %p142 = por %p140, %p141
      %p143 = scmp.ne.s32.totalorder %s129, %s130
      %p144 = scmp.eq.s32.totalorder %s23, 7
      %p145 = por %p143, %p144
      %p147 = scmp.ne.s32.totalorder %s130, %s146
      %p148 = scmp.eq.s32.totalorder %s23, 0
      %p149 = por %p147, %p148
      %s150 = ssub.s32 %s25, %s39
      %p151 = scmp.eq.s32.totalorder %s150, 0
      %s153 = sadd.s32 %s152, 1
      %s154 = scalar_select %p151, %s152, %s153
      %p157 = pneg %p151
      %p158 = scmp.eq.s32.totalorder %s17, 7
      %p159 = por %p157, %p158
      %p160 = scmp.ne.s32.totalorder %s152, %s155
      %p161 = scmp.eq.s32.totalorder %s17, 0
      %p162 = por %p160, %p161
      %p163 = scmp.ne.s32.totalorder %s152, %s155
      %p164 = scmp.eq.s32.totalorder %s22, 7
      %p165 = por %p163, %p164
      %p166 = scmp.ne.s32.totalorder %s155, %s156
      %p167 = scmp.eq.s32.totalorder %s22, 0
      %p168 = por %p166, %p167
      %p169 = scmp.ne.s32.totalorder %s155, %s156
      %p170 = scmp.eq.s32.totalorder %s23, 7
      %p171 = por %p169, %p170
      %p173 = scmp.ne.s32.totalorder %s156, %s172
      %p174 = scmp.eq.s32.totalorder %s23, 0
      %p175 = por %p173, %p174
      %s176 = ssub.s32 %s24, %s43
      %s177 = ssub.s32 %s25, %s39
      %s178 = sor.u32 %s176, %s177
      %p179 = scmp.eq.s32.totalorder %s178, 0
      %s181 = sadd.s32 %s180, 1
      %s182 = scalar_select %p179, %s180, %s181
      %p185 = pneg %p179
      %p186 = scmp.eq.s32.totalorder %s17, 7
      %p187 = por %p185, %p186
      %p188 = scmp.ne.s32.totalorder %s180, %s183
      %p189 = scmp.eq.s32.totalorder %s17, 0
      %p190 = por %p188, %p189
      %p191 = scmp.ne.s32.totalorder %s180, %s183
      %p192 = scmp.eq.s32.totalorder %s22, 7
      %p193 = por %p191, %p192
      %p194 = scmp.ne.s32.totalorder %s183, %s184
      %p195 = scmp.eq.s32.totalorder %s22, 0
      %p196 = por %p194, %p195
      %p197 = scmp.ne.s32.totalorder %s183, %s184
      %p198 = scmp.eq.s32.totalorder %s23, 7
      %p199 = por %p197, %p198
      %p201 = scmp.ne.s32.totalorder %s184, %s200
      %p202 = scmp.eq.s32.totalorder %s23, 0
      %p203 = por %p201, %p202
      %p204 = scmp.le.s32.totalorder 1, %s17
      %p205 = scmp.lt.s32.totalorder %s17, 9
      %p206 = pnand %p204, %p205
      %p207 = pneg %p206
      // Predicated region
      $region9: #{mlp_pallas.1} parent=5 // pred_check
        _
      $region10: #{mlp_pallas.1} parent=5 // pred_check_branch
        %209 = sbr.rel (%p206) target = $region12
      $region11: #{mlp_pallas.1} parent=5 // pred_region
        %s210 = ssub.s32 %s17, 1
      $region12: #{mlp_pallas.1} parent=5 // pred_fallthru
        _
      %p211 = scmp.lt.s32.totalorder %s17, 8
      // Predicated region
      $region13: #{mlp_pallas.1} parent=5 // pred_check
        %p212 = pneg %p211
      $region14: #{mlp_pallas.1} parent=5 // pred_check_branch
        %214 = sbr.rel (%p212) target = $region16
      $region15: #{mlp_pallas.1} parent=5 // pred_region
        // Predicated region
        $region17: #{mlp_pallas.1} parent=15 // pred_check
          %p215 = pneg %p56
        $region18: #{mlp_pallas.1} parent=15 // pred_check_branch
          %217 = sbr.rel (%p215) target = $region20
        $region19: #{mlp_pallas.1} parent=15 // pred_region
          %p218 = scmp.lt.s32.totalorder %s24, 1
          %s219 = scalar_select %p218, %s24, 1
          %s220 = smul.addr %s219, 8
          %s221 = scalar_lea.vmem %s0, %s220
        $region20: #{mlp_pallas.1} parent=15 // pred_fallthru
          _
        // Predicated region
        $region21: #{mlp_pallas.1} parent=15 // pred_check
          %p222 = pneg %p82
        $region22: #{mlp_pallas.1} parent=15 // pred_check_branch
          %224 = sbr.rel (%p222) target = $region24
        $region23: #{mlp_pallas.1} parent=15 // pred_region
          %s225 = sand.u32 %s72, 1
          %s226 = sand.u32 %s72, 1
          %s227 = smul.addr %s226, 128
          %s228 = scalar_lea.vmem [#allocation3], %s227
          %s229 = smul.addr %s26, 8
          %s230 = scalar_lea.vmem %s1, %s229
          // Predicated region
          $region25: #{mlp_pallas.1} parent=23 // pred_check
            _
          $region26: #{mlp_pallas.1} parent=23 // pred_check_branch
            %232 = sbr.rel (0) target = $region28
          $region27: #{mlp_pallas.1} parent=23 // pred_region
            // Predicated region
            $region29: #{mlp_pallas.1} parent=27 // pred_check
              _
            $region30: #{mlp_pallas.1} parent=27 // pred_check_branch
              %234 = sbr.rel (0) target = $region32
            $region31: #{mlp_pallas.1} parent=27 // pred_region
              // Predicated region
              $region44: #{mlp_pallas.1} parent=31 // pred_check
                _
              $region45: #{mlp_pallas.1} parent=31 // pred_check_branch
                %280 = sbr.rel (0) target = $region47
              $region46: #{mlp_pallas.1} parent=31 // pred_region
                loop: start=0, step=1, limit=1
                $region48: #{mlp_pallas.1} parent=46 // loop_pre_header
                  _
                $region49: #{mlp_pallas.1} parent=46 // loop_header
                  %s282 = sphi 0, %s286
                  %p283 = scmp.ge.s32.totalorder %s282, 1
                  %s287 = sphi %s230, %s230
                  %s288 = sphi %s228, %s228
                $region50: #{mlp_pallas.1} parent=46 // loop_header_branch
                  %285 = sbr.rel (%p283) target = $region54
                $region51: #{mlp_pallas.1} parent=46 // loop_body
                  %v289 = vld [vmem:[%s287] sm:$0xff]
                  %290 = vst [vmem:[%s288] sm:$0xff] %v289
                  %v291 = vld [vmem:[%s287 + $0x10] sm:$0xff]
                  %292 = vst [vmem:[%s288 + $0x8] sm:$0xff] %v291
                  %v293 = vld [vmem:[%s287 + $0x20] sm:$0xff]
                  %294 = vst [vmem:[%s288 + $0x10] sm:$0xff] %v293
                  %v295 = vld [vmem:[%s287 + $0x30] sm:$0xff]
                  %296 = vst [vmem:[%s288 + $0x18] sm:$0xff] %v295
                  %v297 = vld [vmem:[%s287 + $0x40] sm:$0xff]
                  %298 = vst [vmem:[%s288 + $0x20] sm:$0xff] %v297
                  %v299 = vld [vmem:[%s287 + $0x50] sm:$0xff]
                  %300 = vst [vmem:[%s288 + $0x28] sm:$0xff] %v299
                  %v301 = vld [vmem:[%s287 + $0x60] sm:$0xff]
                  %302 = vst [vmem:[%s288 + $0x30] sm:$0xff] %v301
                  %v303 = vld [vmem:[%s287 + $0x70] sm:$0xff]
                  %304 = vst [vmem:[%s288 + $0x38] sm:$0xff] %v303
                  %v305 = vld [vmem:[%s287 + $0x80] sm:$0xff]
                  %306 = vst [vmem:[%s288 + $0x40] sm:$0xff] %v305
                  %v307 = vld [vmem:[%s287 + $0x90] sm:$0xff]
                  %308 = vst [vmem:[%s288 + $0x48] sm:$0xff] %v307
                  %v309 = vld [vmem:[%s287 + $0xa0] sm:$0xff]
                  %310 = vst [vmem:[%s288 + $0x50] sm:$0xff] %v309
                  %v311 = vld [vmem:[%s287 + $0xb0] sm:$0xff]
                  %312 = vst [vmem:[%s288 + $0x58] sm:$0xff] %v311
                  %v313 = vld [vmem:[%s287 + $0xc0] sm:$0xff]
                  %314 = vst [vmem:[%s288 + $0x60] sm:$0xff] %v313
                  %v315 = vld [vmem:[%s287 + $0xd0] sm:$0xff]
                  %316 = vst [vmem:[%s288 + $0x68] sm:$0xff] %v315
                  %v317 = vld [vmem:[%s287 + $0xe0] sm:$0xff]
                  %318 = vst [vmem:[%s288 + $0x70] sm:$0xff] %v317
                  %v319 = vld [vmem:[%s287 + $0xf0] sm:$0xff]
                  %320 = vst [vmem:[%s288 + $0x78] sm:$0xff] %v319
                $region52: #{mlp_pallas.1} parent=46 // loop_footer
                  %s286 = sadd.s32 1, %s282
                $region53: #{mlp_pallas.1} parent=46 // loop_footer_branch
                  %281 = sbr.rel target = $region49
                $region54: #{mlp_pallas.1} parent=46 // loop_exit
                  _
              $region47: #{mlp_pallas.1} parent=31 // pred_fallthru
                _
              // Predicated region
              $region55: #{mlp_pallas.1} parent=31 // pred_check
                _
              $region56: #{mlp_pallas.1} parent=31 // pred_check_branch
                %322 = sbr.rel target = $region58
              $region57: #{mlp_pallas.1} parent=31 // pred_region
                _
              $region58: #{mlp_pallas.1} parent=31 // pred_fallthru
                _
            $region32: #{mlp_pallas.1} parent=27 // pred_fallthru
              _
            // Predicated region
            $region33: #{mlp_pallas.1} parent=27 // pred_check
              _
            $region34: #{mlp_pallas.1} parent=27 // pred_check_branch
              %236 = sbr.rel target = $region36
            $region35: #{mlp_pallas.1} parent=27 // pred_region
              %s238 = ssub.s32 256, 1
              loop: start=0, step=1, limit=1
              $region37: #{mlp_pallas.1} parent=35 // loop_pre_header
                _
              $region38: #{mlp_pallas.1} parent=35 // loop_header
                %s240 = sphi 0, %s244
                %p241 = scmp.ge.s32.totalorder %s240, 1
                %s245 = sphi %s230, %s230
                %s246 = sphi %s228, %s228
              $region39: #{mlp_pallas.1} parent=35 // loop_header_branch
                %243 = sbr.rel (%p241) target = $region43
              $region40: #{mlp_pallas.1} parent=35 // loop_body
                %v247 = vld [vmem:[%s245] sm:%s238]
                %248 = vst [vmem:[%s246] sm:%s238] %v247
                %v249 = vld [vmem:[%s245 + $0x10] sm:%s238]
                %250 = vst [vmem:[%s246 + $0x8] sm:%s238] %v249
                %v251 = vld [vmem:[%s245 + $0x20] sm:%s238]
                %252 = vst [vmem:[%s246 + $0x10] sm:%s238] %v251
                %v253 = vld [vmem:[%s245 + $0x30] sm:%s238]
                %254 = vst [vmem:[%s246 + $0x18] sm:%s238] %v253
                %v255 = vld [vmem:[%s245 + $0x40] sm:%s238]
                %256 = vst [vmem:[%s246 + $0x20] sm:%s238] %v255
                %v257 = vld [vmem:[%s245 + $0x50] sm:%s238]
                %258 = vst [vmem:[%s246 + $0x28] sm:%s238] %v257
                %v259 = vld [vmem:[%s245 + $0x60] sm:%s238]
                %260 = vst [vmem:[%s246 + $0x30] sm:%s238] %v259
                %v261 = vld [vmem:[%s245 + $0x70] sm:%s238]
                %262 = vst [vmem:[%s246 + $0x38] sm:%s238] %v261
                %v263 = vld [vmem:[%s245 + $0x80] sm:%s238]
                %264 = vst [vmem:[%s246 + $0x40] sm:%s238] %v263
                %v265 = vld [vmem:[%s245 + $0x90] sm:%s238]
                %266 = vst [vmem:[%s246 + $0x48] sm:%s238] %v265
                %v267 = vld [vmem:[%s245 + $0xa0] sm:%s238]
                %268 = vst [vmem:[%s246 + $0x50] sm:%s238] %v267
                %v269 = vld [vmem:[%s245 + $0xb0] sm:%s238]
                %270 = vst [vmem:[%s246 + $0x58] sm:%s238] %v269
                %v271 = vld [vmem:[%s245 + $0xc0] sm:%s238]
                %272 = vst [vmem:[%s246 + $0x60] sm:%s238] %v271
                %v273 = vld [vmem:[%s245 + $0xd0] sm:%s238]
                %274 = vst [vmem:[%s246 + $0x68] sm:%s238] %v273
                %v275 = vld [vmem:[%s245 + $0xe0] sm:%s238]
                %276 = vst [vmem:[%s246 + $0x70] sm:%s238] %v275
                %v277 = vld [vmem:[%s245 + $0xf0] sm:%s238]
                %278 = vst [vmem:[%s246 + $0x78] sm:%s238] %v277
              $region41: #{mlp_pallas.1} parent=35 // loop_footer
                %s244 = sadd.s32 1, %s240
              $region42: #{mlp_pallas.1} parent=35 // loop_footer_branch
                %239 = sbr.rel target = $region38
              $region43: #{mlp_pallas.1} parent=35 // loop_exit
                _
            $region36: #{mlp_pallas.1} parent=27 // pred_fallthru
              _
          $region28: #{mlp_pallas.1} parent=23 // pred_fallthru
            _
          %323 = vnop
        $region24: #{mlp_pallas.1} parent=15 // pred_fallthru
          _
        // Predicated region
        $region59: #{mlp_pallas.1} parent=15 // pred_check
          %p324 = pneg %p108
        $region60: #{mlp_pallas.1} parent=15 // pred_check_branch
          %326 = sbr.rel (%p324) target = $region62
        $region61: #{mlp_pallas.1} parent=15 // pred_region
          %p327 = scmp.lt.s32.totalorder %s26, 1
          %s328 = scalar_select %p327, %s26, 1
          %s329 = scalar_lea.vmem %s2, %s328
        $region62: #{mlp_pallas.1} parent=15 // pred_fallthru
          _
        // Predicated region
        $region63: #{mlp_pallas.1} parent=15 // pred_check
          %p330 = pneg %p136
        $region64: #{mlp_pallas.1} parent=15 // pred_check_branch
          %332 = sbr.rel (%p330) target = $region66
        $region65: #{mlp_pallas.1} parent=15 // pred_region
          %s333 = sand.u32 %s126, 1
          %s334 = scalar_lea.sflag [#allocation5], %s333
          %s335 = sand.u32 %s126, 1
          %s336 = smul.addr %s335, 128
          %s337 = scalar_lea.vmem [#allocation4], %s336
          %s338 = smul.u32 16, %s26
          %s340 = ssub.s32 2048, 2048
          %341 = vsyncadd %s334, %s340
          %s342 = smul.addr %s338, 2
          %s343 = sadd.s32 %s25, %s342
          %s344 = smul.addr %s343, 128
          %s345 = scalar_lea.hbm %s3, %s344
          %s346 = sshll.u32 %s337, 4
          %s347 = int_to_ptr.vmem [resolvable:$true] %s346
          %352 = dma.hbm_to_vmem [thread:$0]  %s345, 2048, %s347, %s334, 256, 128, 8
        $region66: #{mlp_pallas.1} parent=15 // pred_fallthru
          _
        // Predicated region
        $region67: #{mlp_pallas.1} parent=15 // pred_check
          %p353 = pneg %p162
        $region68: #{mlp_pallas.1} parent=15 // pred_check_branch
          %355 = sbr.rel (%p353) target = $region70
        $region69: #{mlp_pallas.1} parent=15 // pred_region
          %p356 = scmp.lt.s32.totalorder %s25, 1
          %s357 = scalar_select %p356, %s25, 1
          %s358 = scalar_lea.vmem %s4, %s357
        $region70: #{mlp_pallas.1} parent=15 // pred_fallthru
          _
      $region16: #{mlp_pallas.1} parent=5 // pred_fallthru
        _
      %p359 = scmp.le.s32.totalorder 1, %s17
      %p360 = scmp.lt.s32.totalorder %s17, 9
      %p361 = pnand %p359, %p360
      %p362 = pneg %p361
      // Predicated region
      $region71: #{mlp_pallas.1} parent=5 // pred_check
        _
      $region72: #{mlp_pallas.1} parent=5 // pred_check_branch
        %364 = sbr.rel (%p361) target = $region74
      $region73: #{mlp_pallas.1} parent=5 // pred_region
        %s365 = ssub.s32 %s17, 1
        %s366 = sand.u32 %s75, 1
        %s367 = sand.u32 %s75, 1
        %s368 = smul.addr %s367, 128
        %s369 = scalar_lea.vmem [#allocation3], %s368
        // Predicated region
        $region75: #{mlp_pallas.1} parent=73 // pred_check
          %p370 = pneg %p88
        $region76: #{mlp_pallas.1} parent=73 // pred_check_branch
          %372 = sbr.rel (%p370) target = $region78
        $region77: #{mlp_pallas.1} parent=73 // pred_region
          _
        $region78: #{mlp_pallas.1} parent=73 // pred_fallthru
          _
        %s373 = sand.u32 %s129, 1
        %s374 = scalar_lea.sflag [#allocation5], %s373
        %s375 = sand.u32 %s129, 1
        %s376 = smul.addr %s375, 128
        %s377 = scalar_lea.vmem [#allocation4], %s376
        // Predicated region
        $region79: #{mlp_pallas.1} parent=73 // pred_check
          %p378 = pneg %p142
        $region80: #{mlp_pallas.1} parent=73 // pred_check_branch
          %380 = sbr.rel (%p378) target = $region82
        $region81: #{mlp_pallas.1} parent=73 // pred_region
          %381 = dma.done %s374, 2048
        $region82: #{mlp_pallas.1} parent=73 // pred_fallthru
          _
        %p382 = scmp.lt.s32.totalorder %s27, 1
        %s383 = scalar_select %p382, %s27, 1
        %s384 = smul.addr %s383, 8
        %s385 = scalar_lea.vmem %s0, %s384
        %p386 = pneg %p62
        %p387 = pneg %p59
        %s388 = sand.u32 %s75, 1
        %s389 = sand.u32 %s75, 1
        %s390 = smul.addr %s389, 128
        %s391 = scalar_lea.vmem [#allocation3], %s390
        %p392 = pneg %p88
        %p393 = pneg %p85
        %p394 = scmp.lt.s32.totalorder %s29, 1
        %s395 = scalar_select %p394, %s29, 1
        %s396 = scalar_lea.vmem %s2, %s395
        %p397 = pneg %p114
        %p398 = pneg %p111
        %s399 = sand.u32 %s129, 1
        %s400 = scalar_lea.sflag [#allocation5], %s399
        %s401 = sand.u32 %s129, 1
        %s402 = smul.addr %s401, 128
        %s403 = scalar_lea.vmem [#allocation4], %s402
        %p404 = pneg %p142
        %p405 = pneg %p139
        %p406 = scmp.lt.s32.totalorder %s28, 1
        %s407 = scalar_select %p406, %s28, 1
        %s408 = scalar_lea.vmem %s4, %s407
        %p409 = pneg %p168
        %p410 = pneg %p165
        %p411 = pneg %p196
        %p412 = pneg %p193
        %s413 = sand.u32 %s183, 1
        %s414 = scalar_lea.sflag [#allocation6], %s413
        %s415 = sand.u32 %s183, 1
        %s416 = smul.addr %s415, 8
        %s417 = scalar_lea.vmem [#allocation7], %s416
        %p418 = scmp.lt.s32.totalorder %s27, 1
        %s419 = scalar_select %p418, %s27, 1
        %s420 = smul.addr %s419, 8
        %s421 = scalar_lea.vmem %s0, %s420
        %p422 = scmp.lt.s32.totalorder %s29, 1
        %s423 = scalar_select %p422, %s29, 1
        %s424 = scalar_lea.vmem %s2, %s423
        %s425 = smul.u32 16, %s29
        %p426 = scmp.lt.s32.totalorder %s28, 1
        %s427 = scalar_select %p426, %s28, 1
        %s428 = scalar_lea.vmem %s4, %s427
        %p429 = scmp.eq.s32.totalorder %s29, 0
        // Predicated region
        $region83: #{mlp_pallas.1} parent=73 // pred_check
          %p430 = pneg %p429
        $region84: #{mlp_pallas.1} parent=73 // pred_check_branch
          %432 = sbr.rel (%p430) target = $region86
        $region85: #{mlp_pallas.1} parent=73 // pred_region
          %433 = vst [vmem:[#allocation2] sm:$0xff] 0.0
        $region86: #{mlp_pallas.1} parent=73 // pred_fallthru
          _
        %v434 = vld [vmem:[%s421] sm:$0xff]
        %v435 = vld [vmem:[%s369] sm:$0xff]
        %v436 = vld [vmem:[%s369 + $0x8] sm:$0xff]
        %v437 = vld [vmem:[%s369 + $0x10] sm:$0xff]
        %v438 = vld [vmem:[%s369 + $0x18] sm:$0xff]
        %v439 = vld [vmem:[%s369 + $0x20] sm:$0xff]
        %v440 = vld [vmem:[%s369 + $0x28] sm:$0xff]
        %v441 = vld [vmem:[%s369 + $0x30] sm:$0xff]
        %v442 = vld [vmem:[%s369 + $0x38] sm:$0xff]
        %v443 = vld [vmem:[%s369 + $0x40] sm:$0xff]
        %v444 = vld [vmem:[%s369 + $0x48] sm:$0xff]
        %v445 = vld [vmem:[%s369 + $0x50] sm:$0xff]
        %v446 = vld [vmem:[%s369 + $0x58] sm:$0xff]
        %v447 = vld [vmem:[%s369 + $0x60] sm:$0xff]
        %v448 = vld [vmem:[%s369 + $0x68] sm:$0xff]
        %v449 = vld [vmem:[%s369 + $0x70] sm:$0xff]
        %v450 = vld [vmem:[%s369 + $0x78] sm:$0xff]
        %v451 = vld [vmem:[%s424] sm:$0x1]
        %v453 = vlaneseq
        %v454 = vshrl.u32 %v453, 7
        %v455 = vsub.s32 0, %v454
        %v456 = vrot.slane %v451, %v455
        %458 = vmatprep.subr.mxu0 0.0
        %459 = vmatpush1.msra.mxu0 %v450
        %460 = vmatprep.subr.mxu0 0.0
        %461 = vmatpush1.msra.mxu0 %v449
        %462 = vmatprep.subr.mxu0 0.0
        %463 = vmatpush1.msra.mxu0 %v448
        %464 = vmatprep.subr.mxu0 0.0
        %465 = vmatpush1.msra.mxu0 %v447
        %466 = vmatprep.subr.mxu0 0.0
        %467 = vmatpush1.msra.mxu0 %v446
        %468 = vmatprep.subr.mxu0 0.0
        %469 = vmatpush1.msra.mxu0 %v445
        %470 = vmatprep.subr.mxu0 0.0
        %471 = vmatpush1.msra.mxu0 %v444
        %472 = vmatprep.subr.mxu0 0.0
        %473 = vmatpush1.msra.mxu0 %v443
        %474 = vmatprep.subr.mxu0 0.0
        %475 = vmatpush1.msra.mxu0 %v442
        %476 = vmatprep.subr.mxu0 0.0
        %477 = vmatpush1.msra.mxu0 %v441
        %478 = vmatprep.subr.mxu0 0.0
        %479 = vmatpush1.msra.mxu0 %v440
        %480 = vmatprep.subr.mxu0 0.0
        %481 = vmatpush1.msra.mxu0 %v439
        %482 = vmatprep.subr.mxu0 0.0
        %483 = vmatpush1.msra.mxu0 %v438
        %484 = vmatprep.subr.mxu0 0.0
        %485 = vmatpush1.msra.mxu0 %v437
        %486 = vmatprep.subr.mxu0 0.0
        %487 = vmatpush1.msra.mxu0 %v436
        %488 = vmatprep.subr.mxu0 0.0
        %489 = vmatpush1.msra.mxu0 %v435
        %490 = vmatprep.subr.mxu0 0.0
        %491 = vmatpush2.msra.mxu0 0.0
        %492 = vmatprep.subr.mxu0 0.0
        %493 = vmatpush2.msra.mxu0 0.0
        %494 = vmatprep.subr.mxu0 0.0
        %495 = vmatpush2.msra.mxu0 0.0
        %496 = vmatprep.subr.mxu0 0.0
        %497 = vmatpush2.msra.mxu0 0.0
        %498 = vmatprep.subr.mxu0 0.0
        %499 = vmatpush2.msra.mxu0 0.0
        %500 = vmatprep.subr.mxu0 0.0
        %501 = vmatpush2.msra.mxu0 0.0
        %502 = vmatprep.subr.mxu0 0.0
        %503 = vmatpush2.msra.mxu0 0.0
        %504 = vmatprep.subr.mxu0 0.0
        %505 = vmatpush2.msra.mxu0 0.0
        %506 = vmatprep.subr.mxu0 0.0
        %507 = vmatpush2.msra.mxu0 0.0
        %508 = vmatprep.subr.mxu0 0.0
        %509 = vmatpush2.msra.mxu0 0.0
        %510 = vmatprep.subr.mxu0 0.0
        %511 = vmatpush2.msra.mxu0 0.0
        %512 = vmatprep.subr.mxu0 0.0
        %513 = vmatpush2.msra.mxu0 0.0
        %514 = vmatprep.subr.mxu0 0.0
        %515 = vmatpush2.msra.mxu0 0.0
        %516 = vmatprep.subr.mxu0 0.0
        %517 = vmatpush2.msra.mxu0 0.0
        %518 = vmatprep.subr.mxu0 0.0
        %519 = vmatpush2.msra.mxu0 0.0
        %520 = vmatprep.subr.mxu0 0.0
        %521 = vmatpush2.msra.mxu0 0.0
        %522 = vmatprep.mubr.f32.mxu0 0.0
        %523 = vmatmul.mubr.f32.gmra.mxu0 %v434
        %v524 = vpop.f32.mrf.mxu0
        %v525 = vadd.f32 %v456, %v524
        %v526 = vpop.f32.mrf.mxu0
        %527 = vdwg.mxu0
        %v528 = vmul.f32 %v525, 0.5
        %v529 = vmul.f32 %v525, 0.70710677
        %v530 = verf.f32.pop %v529
        %v531 = vadd.f32 %v530, 1.0
        %v532 = vmul.f32 %v528, %v531
        %v533 = vld [vmem:[#allocation2] sm:$0xff]
        %v534 = vld [vmem:[%s377] sm:$0xff]
        %v535 = vld [vmem:[%s377 + $0x8] sm:$0xff]
        %v536 = vld [vmem:[%s377 + $0x10] sm:$0xff]
        %v537 = vld [vmem:[%s377 + $0x18] sm:$0xff]
        %v538 = vld [vmem:[%s377 + $0x20] sm:$0xff]
        %v539 = vld [vmem:[%s377 + $0x28] sm:$0xff]
        %v540 = vld [vmem:[%s377 + $0x30] sm:$0xff]
        %v541 = vld [vmem:[%s377 + $0x38] sm:$0xff]
        %v542 = vld [vmem:[%s377 + $0x40] sm:$0xff]
        %v543 = vld [vmem:[%s377 + $0x48] sm:$0xff]
        %v544 = vld [vmem:[%s377 + $0x50] sm:$0xff]
        %v545 = vld [vmem:[%s377 + $0x58] sm:$0xff]
        %v546 = vld [vmem:[%s377 + $0x60] sm:$0xff]
        %v547 = vld [vmem:[%s377 + $0x68] sm:$0xff]
        %v548 = vld [vmem:[%s377 + $0x70] sm:$0xff]
        %v549 = vld [vmem:[%s377 + $0x78] sm:$0xff]
        %550 = vmatprep.subr.mxu0 0.0
        %551 = vmatpush1.msra.mxu0 %v549
        %552 = vmatprep.subr.mxu0 0.0
        %553 = vmatpush1.msra.mxu0 %v548
        %554 = vmatprep.subr.mxu0 0.0
        %555 = vmatpush1.msra.mxu0 %v547
        %556 = vmatprep.subr.mxu0 0.0
        %557 = vmatpush1.msra.mxu0 %v546
        %558 = vmatprep.subr.mxu0 0.0
        %559 = vmatpush1.msra.mxu0 %v545
        %560 = vmatprep.subr.mxu0 0.0
        %561 = vmatpush1.msra.mxu0 %v544
        %562 = vmatprep.subr.mxu0 0.0
        %563 = vmatpush1.msra.mxu0 %v543
        %564 = vmatprep.subr.mxu0 0.0
        %565 = vmatpush1.msra.mxu0 %v542
        %566 = vmatprep.subr.mxu0 0.0
        %567 = vmatpush1.msra.mxu0 %v541
        %568 = vmatprep.subr.mxu0 0.0
        %569 = vmatpush1.msra.mxu0 %v540
        %570 = vmatprep.subr.mxu0 0.0
        %571 = vmatpush1.msra.mxu0 %v539
        %572 = vmatprep.subr.mxu0 0.0
        %573 = vmatpush1.msra.mxu0 %v538
        %574 = vmatprep.subr.mxu0 0.0
        %575 = vmatpush1.msra.mxu0 %v537
        %576 = vmatprep.subr.mxu0 0.0
        %577 = vmatpush1.msra.mxu0 %v536
        %578 = vmatprep.subr.mxu0 0.0
        %579 = vmatpush1.msra.mxu0 %v535
        %580 = vmatprep.subr.mxu0 0.0
        %581 = vmatpush1.msra.mxu0 %v534
        %582 = vmatprep.subr.mxu0 0.0
        %583 = vmatpush2.msra.mxu0 0.0
        %584 = vmatprep.subr.mxu0 0.0
        %585 = vmatpush2.msra.mxu0 0.0
        %586 = vmatprep.subr.mxu0 0.0
        %587 = vmatpush2.msra.mxu0 0.0
        %588 = vmatprep.subr.mxu0 0.0
        %589 = vmatpush2.msra.mxu0 0.0
        %590 = vmatprep.subr.mxu0 0.0
        %591 = vmatpush2.msra.mxu0 0.0
        %592 = vmatprep.subr.mxu0 0.0
        %593 = vmatpush2.msra.mxu0 0.0
        %594 = vmatprep.subr.mxu0 0.0
        %595 = vmatpush2.msra.mxu0 0.0
        %596 = vmatprep.subr.mxu0 0.0
        %597 = vmatpush2.msra.mxu0 0.0
        %598 = vmatprep.subr.mxu0 0.0
        %599 = vmatpush2.msra.mxu0 0.0
        %600 = vmatprep.subr.mxu0 0.0
        %601 = vmatpush2.msra.mxu0 0.0
        %602 = vmatprep.subr.mxu0 0.0
        %603 = vmatpush2.msra.mxu0 0.0
        %604 = vmatprep.subr.mxu0 0.0
        %605 = vmatpush2.msra.mxu0 0.0
        %606 = vmatprep.subr.mxu0 0.0
        %607 = vmatpush2.msra.mxu0 0.0
        %608 = vmatprep.subr.mxu0 0.0
        %609 = vmatpush2.msra.mxu0 0.0
        %610 = vmatprep.subr.mxu0 0.0
        %611 = vmatpush2.msra.mxu0 0.0
        %612 = vmatprep.subr.mxu0 0.0
        %613 = vmatpush2.msra.mxu0 0.0
        %614 = vmatprep.mubr.f32.mxu0 0.0
        %615 = vmatmul.mubr.f32.gmra.mxu0 %v532
        %v616 = vpop.f32.mrf.mxu0
        %v617 = vadd.f32 0.0, %v616
        %v618 = vpop.f32.mrf.mxu0
        %619 = vdwg.mxu0
        %v620 = vadd.f32 %v533, %v617
        %621 = vst [vmem:[#allocation2] sm:$0xff] %v620
        %p622 = scmp.eq.s32.totalorder %s29, 1
        // Predicated region
        $region87: #{mlp_pallas.1} parent=73 // pred_check
          %p623 = pneg %p622
        $region88: #{mlp_pallas.1} parent=73 // pred_check_branch
          %625 = sbr.rel (%p623) target = $region90
        $region89: #{mlp_pallas.1} parent=73 // pred_region
          %v626 = vld [vmem:[#allocation2] sm:$0xff]
          %v627 = vld [vmem:[%s428] sm:$0x1]
          %v629 = vlaneseq
          %v630 = vshrl.u32 %v629, 7
          %v631 = vsub.s32 0, %v630
          %v632 = vrot.slane %v627, %v631
          %v634 = vadd.f32 %v626, %v632
          %635 = vst [vmem:[%s417] sm:$0xff] %v634
        $region90: #{mlp_pallas.1} parent=73 // pred_fallthru
          _
        %s636 = sand.u32 %s183, 1
        %s637 = scalar_lea.sflag [#allocation6], %s636
        %s638 = sand.u32 %s183, 1
        %s639 = smul.addr %s638, 8
        %s640 = scalar_lea.vmem [#allocation7], %s639
        // Predicated region
        $region91: #{mlp_pallas.1} parent=73 // pred_check
          %p641 = pneg %p193
        $region92: #{mlp_pallas.1} parent=73 // pred_check_branch
          %643 = sbr.rel (%p641) target = $region94
        $region93: #{mlp_pallas.1} parent=73 // pred_region
          %s645 = ssub.s32 128, 128
          %646 = vsyncadd %s637, %s645
          %s647 = smul.addr %s27, 2
          %s648 = sadd.s32 %s28, %s647
          %s649 = smul.addr %s648, 128
          %s650 = scalar_lea.hbm %s5, %s649
          %s652 = sshll.u32 %s640, 4
          %s653 = int_to_ptr.vmem [resolvable:$true] %s652
          %655 = dma.vmem_to_hbm [thread:$0]  %s653, 128, %s650, %s637
        $region94: #{mlp_pallas.1} parent=73 // pred_fallthru
          _
      $region74: #{mlp_pallas.1} parent=5 // pred_fallthru
        _
      %p656 = scmp.le.s32.totalorder 2, %s17
      // Predicated region
      $region95: #{mlp_pallas.1} parent=5 // pred_check
        %p657 = pneg %p656
      $region96: #{mlp_pallas.1} parent=5 // pred_check_branch
        %659 = sbr.rel (%p657) target = $region98
      $region97: #{mlp_pallas.1} parent=5 // pred_region
        %s660 = ssub.s32 %s17, 2
        // Predicated region
        $region99: #{mlp_pallas.1} parent=97 // pred_check
          %p661 = pneg %p199
        $region100: #{mlp_pallas.1} parent=97 // pred_check_branch
          %663 = sbr.rel (%p661) target = $region102
        $region101: #{mlp_pallas.1} parent=97 // pred_region
          %s664 = sand.u32 %s184, 1
          %s665 = scalar_lea.sflag [#allocation6], %s664
          %s666 = sand.u32 %s184, 1
          %s667 = smul.addr %s666, 8
          %s668 = scalar_lea.vmem [#allocation7], %s667
          %669 = dma.done %s665, 128
        $region102: #{mlp_pallas.1} parent=97 // pred_fallthru
          _
      $region98: #{mlp_pallas.1} parent=5 // pred_fallthru
        _
    $region6: #{mlp_pallas.1} parent=1 // loop_footer
      %s21 = sadd.s32 1, %s17
    $region7: #{mlp_pallas.1} parent=1 // loop_footer_branch
      %16 = sbr.rel target = $region3
    $region8: #{mlp_pallas.1} parent=1 // loop_exit
      _
    %670 = vsyncpa [#allocation5], 1
    %s671 = scalar_lea.sflag [#allocation5], 1
    %672 = vsyncpa %s671, 1
    %673 = vsyncpa [#allocation6], 1
    %s674 = scalar_lea.sflag [#allocation6], 1
    %675 = vsyncpa %s674, 1

</llo_original>
